<compile_context>
chip_gen: v6e
topology: v6e:2x2x1
jax: 0.10.0
libtpu: 0.0.40
codegen_flags: <defaults>
</compile_context>

<pallas_src>
import jax
import jax.numpy as jnp
from jax.experimental import pallas as pl
from jax.experimental.pallas import tpu as pltpu


def _policy_kernel(xa_ref, w1a_ref, w2_ref, b2_ref, out_ref):
    # xa : (5, TB)   = [x.T ; ones], batch on lanes
    # w1a: (128, 5)  = [w1 | b1]
    # w2 : (2, 128), b2: (2, 1)

    # fc1 (+ folded bias) on the MXU; (dropout == identity in eval); ReLU on VPU.
    h = jnp.dot(w1a_ref[...], xa_ref[...], preferred_element_type=jnp.float32)
    h = jnp.maximum(h, 0.0)                                   # (128, TB)

    # fc2 on the MXU: (2, 128) @ (128, TB) -> (2, TB)
    s = jnp.dot(w2_ref[...], h, preferred_element_type=jnp.float32) + b2_ref[...]
    s0 = s[0:1, :]
    s1 = s[1:2, :]

    # 2-class softmax over the class axis, one sigmoid per class.
    # No concat relayout, no cross-lane reduce; lane-dense sliced stores.
    out_ref[0:1, :] = 1.0 / (1.0 + jnp.exp(s1 - s0))
    out_ref[1:2, :] = 1.0 / (1.0 + jnp.exp(s0 - s1))


def policy_net_forward(x, w1, b1, w2, b2, *, tile_b=8192,
                       input_transposed=False, output_transposed=False):
    """PolicyNet forward.

    x : (B, 4) f32   (or (4, B) if input_transposed=True)
    w1: (128, 4), b1: (128,), w2: (2, 128), b2: (2,)  -- native PyTorch layouts
    returns (B, 2) softmax probabilities ((2, B) if output_transposed=True).
    """
    if input_transposed:
        xT = x.astype(jnp.float32)                 # (4, B) already transposed
        B = xT.shape[1]
    else:
        B = x.shape[0]
        xT = x.astype(jnp.float32).T               # (4, B)

    # Batch tile: multiple of 128 (batch lives on lanes).  Large default tile
    # amortizes the ~0.35us/step grid overhead; clamp so the (128, tb) f32
    # activation stays <= 8 MiB of VMEM (safe on v5e/v6e/v7x).
    tile_b = max(128, min(int(tile_b), 16384))
    tile_b = (tile_b // 128) * 128
    if B <= tile_b:
        tb = 128 * pl.cdiv(max(B, 1), 128)         # single minimal tile
    else:
        tb = tile_b                                # >= 2 tiles -> both v7x TCs
    n_tiles = pl.cdiv(B, tb)
    Bp = n_tiles * tb

    # [x.T ; 1], zero-padded on the batch/lane axis (pad lanes are discarded).
    ones = jnp.ones((1, B), jnp.float32)
    xa = jnp.pad(jnp.concatenate([xT, ones], axis=0), ((0, 0), (0, Bp - B)))

    # [w1 | b1] so the fc1 bias rides the MXU matmul.
    w1a = jnp.concatenate(
        [w1.astype(jnp.float32), b1.astype(jnp.float32).reshape(128, 1)], axis=1)
    w2f = w2.astype(jnp.float32)
    b2c = b2.astype(jnp.float32).reshape(2, 1)

    out_t = pl.pallas_call(
        _policy_kernel,
        out_shape=jax.ShapeDtypeStruct((2, Bp), jnp.float32),
        grid=(n_tiles,),
        in_specs=[
            pl.BlockSpec((5, tb), lambda i: (0, i)),      # [x.T;1] tile (streamed)
            pl.BlockSpec((128, 5), lambda i: (0, 0)),     # [w1|b1]  (resident)
            pl.BlockSpec((2, 128), lambda i: (0, 0)),     # w2       (resident)
            pl.BlockSpec((2, 1), lambda i: (0, 0)),       # b2       (resident)
        ],
        out_specs=pl.BlockSpec((2, tb), lambda i: (0, i)),  # lane-dense output
        compiler_params=pltpu.CompilerParams(
            dimension_semantics=("parallel",),
            vmem_limit_bytes=32 * 1024 * 1024,
        ),
    )(xa, w1a, w2f, b2c)

    out_t = out_t[:, :B]
    if output_transposed:
        return out_t                                # (2, B), lane-dense
    return out_t.T                                  # (B, 2), PyTorch layout


def _reference(x, w1, b1, w2, b2):
    h = jnp.maximum(x @ w1.T + b1, 0.0)
    s = h @ w2.T + b2
    return jax.nn.softmax(s, axis=1)


if __name__ == "__main__":
    key = jax.random.PRNGKey(0)
    k_x, k_w1, k_b1, k_w2, k_b2, k_x2 = jax.random.split(key, 6)

    B, IN, HID, OUT = 2, 4, 128, 2

    x = jax.random.normal(k_x, (B, IN), dtype=jnp.float32)

    # Deterministic parameter init (PyTorch-Linear-like uniform ranges),
    # stored in native PyTorch (out, in) layout.
    bound1 = 1.0 / (IN ** 0.5)
    w1 = jax.random.uniform(k_w1, (HID, IN), jnp.float32, -bound1, bound1)
    b1 = jax.random.uniform(k_b1, (HID,), jnp.float32, -bound1, bound1)
    bound2 = 1.0 / (HID ** 0.5)
    w2 = jax.random.uniform(k_w2, (OUT, HID), jnp.float32, -bound2, bound2)
    b2 = jax.random.uniform(k_b2, (OUT,), jnp.float32, -bound2, bound2)

    # Small-batch check (single tile, padded to 128 lanes).
    out = policy_net_forward(x, w1, b1, w2, b2)
    out = jax.block_until_ready(out)
    ref = _reference(x, w1, b1, w2, b2)
    assert out.shape == (B, OUT)
    assert jnp.allclose(out, ref, atol=1e-5, rtol=1e-5)
    assert jnp.allclose(jnp.sum(out, axis=1), 1.0, atol=1e-5)

    # Multi-tile check (exercises the batch grid + ragged last tile).
    B2 = 300
    x2 = jax.random.normal(k_x2, (B2, IN), dtype=jnp.float32)
    out2 = policy_net_forward(x2, w1, b1, w2, b2, tile_b=128)
    out2 = jax.block_until_ready(out2)
    ref2 = _reference(x2, w1, b1, w2, b2)
    assert out2.shape == (B2, OUT)
    assert jnp.allclose(out2, ref2, atol=1e-5, rtol=1e-5)
    assert jnp.allclose(jnp.sum(out2, axis=1), 1.0, atol=1e-5)

    # Transposed-layout path (skips wrapper transpose passes end-to-end).
    out3 = policy_net_forward(x2.T, w1, b1, w2, b2, tile_b=256,
                              input_transposed=True, output_transposed=True)
    out3 = jax.block_until_ready(out3)
    assert out3.shape == (OUT, B2)
    assert jnp.allclose(out3, ref2.T, atol=1e-5, rtol=1e-5)

    print("KERNEL_OK")
</pallas_src>

<mosaic_0001>
module attributes {stable_mosaic.version = 11 : i64} {
  func.func @_policy_kernel(%arg0: i32, %arg1: memref<5x128xf32, #tpu.memory_space<vmem>>, %arg2: memref<128x5xf32, #tpu.memory_space<vmem>>, %arg3: memref<2x128xf32, #tpu.memory_space<vmem>>, %arg4: memref<2x1xf32, #tpu.memory_space<vmem>>, %arg5: memref<2x128xf32, #tpu.memory_space<vmem>>) attributes {dimension_semantics = [#tpu.dimension_semantics<parallel>], iteration_bounds = array<i64: 1>, scalar_prefetch = 0 : i64, scratch_operands = 0 : i64, tpu.core_type = #tpu.core_type<tc>, window_params = [{transform_indices = @transform_0, window_bounds = array<i64: 5, 128>}, {pipeline_mode = #tpu.pipeline_mode<synchronous>, transform_indices = @transform_1, window_bounds = array<i64: 128, 5>}, {pipeline_mode = #tpu.pipeline_mode<synchronous>, transform_indices = @transform_2, window_bounds = array<i64: 2, 128>}, {pipeline_mode = #tpu.pipeline_mode<synchronous>, transform_indices = @transform_3, window_bounds = array<i64: 2, 1>}, {transform_indices = @transform_4, window_bounds = array<i64: 2, 128>}]} {
    %c0 = arith.constant 0 : index
    %c0_0 = arith.constant 0 : index
    %0 = vector.load %arg2[%c0, %c0_0] : memref<128x5xf32, #tpu.memory_space<vmem>>, vector<128x5xf32>
    %c0_1 = arith.constant 0 : index
    %c0_2 = arith.constant 0 : index
    %1 = vector.load %arg1[%c0_1, %c0_2] : memref<5x128xf32, #tpu.memory_space<vmem>>, vector<5x128xf32>
    %cst = arith.constant dense<0.000000e+00> : vector<128x128xf32>
    %2 = tpu.matmul %0, %1, %cst {dimension_numbers = #tpu.dot_dimension_numbers<[1], [0], [0], [1], [0, 0, 1, 1], [], []>} : vector<128x5xf32>, vector<5x128xf32>, vector<128x128xf32> -> vector<128x128xf32>
    %cst_3 = arith.constant 0.000000e+00 : f32
    %3 = vector.broadcast %cst_3 : f32 to vector<128x128xf32>
    %4 = arith.maximumf %2, %3 : vector<128x128xf32>
    %c0_4 = arith.constant 0 : index
    %c0_5 = arith.constant 0 : index
    %5 = vector.load %arg3[%c0_4, %c0_5] : memref<2x128xf32, #tpu.memory_space<vmem>>, vector<2x128xf32>
    %cst_6 = arith.constant dense<0.000000e+00> : vector<2x128xf32>
    %6 = tpu.matmul %5, %4, %cst_6 {dimension_numbers = #tpu.dot_dimension_numbers<[1], [0], [0], [1], [0, 0, 1, 1], [], []>} : vector<2x128xf32>, vector<128x128xf32>, vector<2x128xf32> -> vector<2x128xf32>
    %c0_7 = arith.constant 0 : index
    %c0_8 = arith.constant 0 : index
    %7 = vector.load %arg4[%c0_7, %c0_8] : memref<2x1xf32, #tpu.memory_space<vmem>>, vector<2x1xf32>
    %8 = vector.broadcast %7 : vector<2x1xf32> to vector<2x128xf32>
    %9 = arith.addf %6, %8 : vector<2x128xf32>
    %10 = vector.extract_strided_slice %9 {offsets = [0, 0], sizes = [1, 128], strides = [1, 1]} : vector<2x128xf32> to vector<1x128xf32>
    %11 = vector.extract_strided_slice %9 {offsets = [1, 0], sizes = [1, 128], strides = [1, 1]} : vector<2x128xf32> to vector<1x128xf32>
    %12 = arith.subf %11, %10 : vector<1x128xf32>
    %13 = math.exp %12 : vector<1x128xf32>
    %cst_9 = arith.constant 1.000000e+00 : f32
    %14 = vector.broadcast %cst_9 : f32 to vector<1x128xf32>
    %15 = arith.addf %14, %13 : vector<1x128xf32>
    %cst_10 = arith.constant 1.000000e+00 : f32
    %16 = vector.broadcast %cst_10 : f32 to vector<1x128xf32>
    %17 = arith.divf %16, %15 : vector<1x128xf32>
    %c0_11 = arith.constant 0 : index
    %c0_12 = arith.constant 0 : index
    %18 = vector.load %arg5[%c0_11, %c0_12] : memref<2x128xf32, #tpu.memory_space<vmem>>, vector<1x128xf32>
    tpu.vector_store %arg5[%c0_11, %c0_12], %17 {strides = array<i32>} : memref<2x128xf32, #tpu.memory_space<vmem>>, vector<1x128xf32>,
    %19 = arith.subf %10, %11 : vector<1x128xf32>
    %20 = math.exp %19 : vector<1x128xf32>
    %cst_13 = arith.constant 1.000000e+00 : f32
    %21 = vector.broadcast %cst_13 : f32 to vector<1x128xf32>
    %22 = arith.addf %21, %20 : vector<1x128xf32>
    %cst_14 = arith.constant 1.000000e+00 : f32
    %23 = vector.broadcast %cst_14 : f32 to vector<1x128xf32>
    %24 = arith.divf %23, %22 : vector<1x128xf32>
    %c1 = arith.constant 1 : index
    %c0_15 = arith.constant 0 : index
    %25 = vector.load %arg5[%c1, %c0_15] : memref<2x128xf32, #tpu.memory_space<vmem>>, vector<1x128xf32>
    tpu.vector_store %arg5[%c1, %c0_15], %24 {strides = array<i32>} : memref<2x128xf32, #tpu.memory_space<vmem>>, vector<1x128xf32>,
    return
  }
  func.func @transform_0(%arg0: i32) -> (i32, i32) {
    %c0_i32 = arith.constant 0 : i32
    %c0_i32_0 = arith.constant 0 : i32
    return %c0_i32, %arg0 : i32, i32
  }
  func.func @transform_1(%arg0: i32) -> (i32, i32) {
    %c0_i32 = arith.constant 0 : i32
    %c0_i32_0 = arith.constant 0 : i32
    %c0_i32_1 = arith.constant 0 : i32
    return %c0_i32, %c0_i32_0 : i32, i32
  }
  func.func @transform_2(%arg0: i32) -> (i32, i32) {
    %c0_i32 = arith.constant 0 : i32
    %c0_i32_0 = arith.constant 0 : i32
    %c0_i32_1 = arith.constant 0 : i32
    return %c0_i32, %c0_i32_0 : i32, i32
  }
  func.func @transform_3(%arg0: i32) -> (i32, i32) {
    %c0_i32 = arith.constant 0 : i32
    %c0_i32_0 = arith.constant 0 : i32
    %c0_i32_1 = arith.constant 0 : i32
    return %c0_i32, %c0_i32_0 : i32, i32
  }
  func.func @transform_4(%arg0: i32) -> (i32, i32) {
    %c0_i32 = arith.constant 0 : i32
    %c0_i32_0 = arith.constant 0 : i32
    return %c0_i32, %arg0 : i32, i32
  }
}

</mosaic_0001>

<llo_original>
// kernel: tpu_custom_call.1
$region0: #{tpu_custom_call.1}
  #allocation0 [shape = 'u32[]', space=smem, size = 0x4, offset = 0x4, fixed_abs, tag = 'smem constant byte address 0x4 - core index']
  #allocation1 [shape = 'u32[144,128]{1,0:T(1,128)}', space=vmem, size = 0x12000, scoped, tag = 'internal scratch']
  %s0 = inlined_call_operand.vmem [shape: f32[5,128], index: 0, kind: input, shape index: {}]
  %s1 = inlined_call_operand.vmem [shape: f32[128,5], index: 1, kind: input, shape index: {}]
  %s2 = inlined_call_operand.vmem [shape: f32[2,128], index: 2, kind: input, shape index: {}]
  %s3 = inlined_call_operand.vmem [shape: f32[2,1], index: 3, kind: input, shape index: {}]
  %s4 = inlined_call_operand.hbm [shape: f32[2,128], index: 4, kind: output, shape index: {}]
  %s5 = sld [smem:[#allocation0]]
  $region26: #{tpu_custom_call.1} parent=0
    _
  %s7 = ssub.s32 1, %s5
  %s8 = scalar_select 0, %s7, %s5
  $region1: #{tpu_custom_call.1} parent=0
    #allocation2 [shape = 'u8[1024]{0}', space=vmem, size = 0x400, scoped, tag = 'output window, operand 0, single buffered']
    #allocation3 [shape = 's32[1]{0}', space=sflag, size = 0x4, scoped, tag = 'scoped memory for tpu_custom_call.1']
    %9 = vsyncpa [#allocation3], 0
    // Predicated region
    $region2: #{tpu_custom_call.1} parent=1 // pred_check
      _
    $region3: #{tpu_custom_call.1} parent=1 // pred_check_branch
      %11 = sbr.rel (0) target = $region5
    $region4: #{tpu_custom_call.1} parent=1 // pred_region
      _
    $region5: #{tpu_custom_call.1} parent=1 // pred_fallthru
      _
    // Predicated region
    $region6: #{tpu_custom_call.1} parent=1 // pred_check
      _
    $region7: #{tpu_custom_call.1} parent=1 // pred_check_branch
      %13 = sbr.rel (0) target = $region9
    $region8: #{tpu_custom_call.1} parent=1 // pred_region
      _
    $region9: #{tpu_custom_call.1} parent=1 // pred_fallthru
      _
    // Predicated region
    $region10: #{tpu_custom_call.1} parent=1 // pred_check
      _
    $region11: #{tpu_custom_call.1} parent=1 // pred_check_branch
      %15 = sbr.rel (0) target = $region13
    $region12: #{tpu_custom_call.1} parent=1 // pred_region
      _
    $region13: #{tpu_custom_call.1} parent=1 // pred_fallthru
      _
    // Predicated region
    $region14: #{tpu_custom_call.1} parent=1 // pred_check
      _
    $region15: #{tpu_custom_call.1} parent=1 // pred_check_branch
      %17 = sbr.rel (0) target = $region17
    $region16: #{tpu_custom_call.1} parent=1 // pred_region
      _
    $region17: #{tpu_custom_call.1} parent=1 // pred_fallthru
      _
    %v18 = vld [vmem:[%s1] sm:$0xff]
    %v19 = vld [vmem:[%s1 + $0x8] sm:$0xff]
    %v20 = vld [vmem:[%s1 + $0x10] sm:$0xff]
    %v21 = vld [vmem:[%s1 + $0x18] sm:$0xff]
    %v22 = vld [vmem:[%s1 + $0x20] sm:$0xff]
    %v23 = vld [vmem:[%s1 + $0x28] sm:$0xff]
    %v24 = vld [vmem:[%s1 + $0x30] sm:$0xff]
    %v25 = vld [vmem:[%s1 + $0x38] sm:$0xff]
    %v26 = vld [vmem:[%s1 + $0x40] sm:$0xff]
    %v27 = vld [vmem:[%s1 + $0x48] sm:$0xff]
    %v28 = vld [vmem:[%s1 + $0x50] sm:$0xff]
    %v29 = vld [vmem:[%s1 + $0x58] sm:$0xff]
    %v30 = vld [vmem:[%s1 + $0x60] sm:$0xff]
    %v31 = vld [vmem:[%s1 + $0x68] sm:$0xff]
    %v32 = vld [vmem:[%s1 + $0x70] sm:$0xff]
    %v33 = vld [vmem:[%s1 + $0x78] sm:$0xff]
    %v34 = vld [vmem:[%s0] sm:$0x1f]
    %vm35 = vcmask 39936
    %v37 = vsel %vm35, %v18, 0
    %v40 = vsel %vm35, %v19, 0
    %v43 = vsel %vm35, %v20, 0
    %v46 = vsel %vm35, %v21, 0
    %v49 = vsel %vm35, %v22, 0
    %v52 = vsel %vm35, %v23, 0
    %v55 = vsel %vm35, %v24, 0
    %v58 = vsel %vm35, %v25, 0
    %v61 = vsel %vm35, %v26, 0
    %v64 = vsel %vm35, %v27, 0
    %v67 = vsel %vm35, %v28, 0
    %v70 = vsel %vm35, %v29, 0
    %v73 = vsel %vm35, %v30, 0
    %v76 = vsel %vm35, %v31, 0
    %v79 = vsel %vm35, %v32, 0
    %v82 = vsel %vm35, %v33, 0
    %vm84 = vcmask 1044480
    %v86 = vsel %vm84, %v34, 0
    %88 = vmatprep.subr.mxu0 0.0
    %89 = vmatpush1.msra.mxu0 0.0
    %90 = vmatprep.subr.mxu0 0.0
    %91 = vmatpush1.msra.mxu0 0.0
    %92 = vmatprep.subr.mxu0 0.0
    %93 = vmatpush1.msra.mxu0 0.0
    %94 = vmatprep.subr.mxu0 0.0
    %95 = vmatpush1.msra.mxu0 0.0
    %96 = vmatprep.subr.mxu0 0.0
    %97 = vmatpush1.msra.mxu0 0.0
    %98 = vmatprep.subr.mxu0 0.0
    %99 = vmatpush1.msra.mxu0 0.0
    %100 = vmatprep.subr.mxu0 0.0
    %101 = vmatpush1.msra.mxu0 0.0
    %102 = vmatprep.subr.mxu0 0.0
    %103 = vmatpush1.msra.mxu0 0.0
    %104 = vmatprep.subr.mxu0 0.0
    %105 = vmatpush1.msra.mxu0 0.0
    %106 = vmatprep.subr.mxu0 0.0
    %107 = vmatpush1.msra.mxu0 0.0
    %108 = vmatprep.subr.mxu0 0.0
    %109 = vmatpush1.msra.mxu0 0.0
    %110 = vmatprep.subr.mxu0 0.0
    %111 = vmatpush1.msra.mxu0 0.0
    %112 = vmatprep.subr.mxu0 0.0
    %113 = vmatpush1.msra.mxu0 0.0
    %114 = vmatprep.subr.mxu0 0.0
    %115 = vmatpush1.msra.mxu0 0.0
    %116 = vmatprep.subr.mxu0 0.0
    %117 = vmatpush1.msra.mxu0 0.0
    %118 = vmatprep.subr.mxu0 0.0
    %119 = vmatpush1.msra.mxu0 %v86
    %120 = vmatprep.subr.mxu0 0.0
    %121 = vmatpush2.msra.mxu0 0.0
    %122 = vmatprep.subr.mxu0 0.0
    %123 = vmatpush2.msra.mxu0 0.0
    %124 = vmatprep.subr.mxu0 0.0
    %125 = vmatpush2.msra.mxu0 0.0
    %126 = vmatprep.subr.mxu0 0.0
    %127 = vmatpush2.msra.mxu0 0.0
    %128 = vmatprep.subr.mxu0 0.0
    %129 = vmatpush2.msra.mxu0 0.0
    %130 = vmatprep.subr.mxu0 0.0
    %131 = vmatpush2.msra.mxu0 0.0
    %132 = vmatprep.subr.mxu0 0.0
    %133 = vmatpush2.msra.mxu0 0.0
    %134 = vmatprep.subr.mxu0 0.0
    %135 = vmatpush2.msra.mxu0 0.0
    %136 = vmatprep.subr.mxu0 0.0
    %137 = vmatpush2.msra.mxu0 0.0
    %138 = vmatprep.subr.mxu0 0.0
    %139 = vmatpush2.msra.mxu0 0.0
    %140 = vmatprep.subr.mxu0 0.0
    %141 = vmatpush2.msra.mxu0 0.0
    %142 = vmatprep.subr.mxu0 0.0
    %143 = vmatpush2.msra.mxu0 0.0
    %144 = vmatprep.subr.mxu0 0.0
    %145 = vmatpush2.msra.mxu0 0.0
    %146 = vmatprep.subr.mxu0 0.0
    %147 = vmatpush2.msra.mxu0 0.0
    %148 = vmatprep.subr.mxu0 0.0
    %149 = vmatpush2.msra.mxu0 0.0
    %150 = vmatprep.subr.mxu0 0.0
    %151 = vmatpush2.msra.mxu0 0.0
    %152 = vmatprep.mubr.f32.mxu0 0.0
    %153 = vmatmul.mubr.f32.gmra.mxu0 %v37
    %v154 = vpop.f32.mrf.mxu0
    %v155 = vadd.f32 0.0, %v154
    %v156 = vpop.f32.mrf.mxu0
    %157 = vmatprep.mubr.f32.mxu0 0.0
    %158 = vmatmul.mubr.f32.gmra.mxu0 %v40
    %v159 = vpop.f32.mrf.mxu0
    %v160 = vadd.f32 0.0, %v159
    %v161 = vpop.f32.mrf.mxu0
    %162 = vmatprep.mubr.f32.mxu0 0.0
    %163 = vmatmul.mubr.f32.gmra.mxu0 %v43
    %v164 = vpop.f32.mrf.mxu0
    %v165 = vadd.f32 0.0, %v164
    %v166 = vpop.f32.mrf.mxu0
    %167 = vmatprep.mubr.f32.mxu0 0.0
    %168 = vmatmul.mubr.f32.gmra.mxu0 %v46
    %v169 = vpop.f32.mrf.mxu0
    %v170 = vadd.f32 0.0, %v169
    %v171 = vpop.f32.mrf.mxu0
    %172 = vmatprep.mubr.f32.mxu0 0.0
    %173 = vmatmul.mubr.f32.gmra.mxu0 %v49
    %v174 = vpop.f32.mrf.mxu0
    %v175 = vadd.f32 0.0, %v174
    %v176 = vpop.f32.mrf.mxu0
    %177 = vmatprep.mubr.f32.mxu0 0.0
    %178 = vmatmul.mubr.f32.gmra.mxu0 %v52
    %v179 = vpop.f32.mrf.mxu0
    %v180 = vadd.f32 0.0, %v179
    %v181 = vpop.f32.mrf.mxu0
    %182 = vmatprep.mubr.f32.mxu0 0.0
    %183 = vmatmul.mubr.f32.gmra.mxu0 %v55
    %v184 = vpop.f32.mrf.mxu0
    %v185 = vadd.f32 0.0, %v184
    %v186 = vpop.f32.mrf.mxu0
    %187 = vmatprep.mubr.f32.mxu0 0.0
    %188 = vmatmul.mubr.f32.gmra.mxu0 %v58
    %v189 = vpop.f32.mrf.mxu0
    %v190 = vadd.f32 0.0, %v189
    %v191 = vpop.f32.mrf.mxu0
    %192 = vmatprep.mubr.f32.mxu0 0.0
    %193 = vmatmul.mubr.f32.gmra.mxu0 %v61
    %v194 = vpop.f32.mrf.mxu0
    %v195 = vadd.f32 0.0, %v194
    %v196 = vpop.f32.mrf.mxu0
    %197 = vmatprep.mubr.f32.mxu0 0.0
    %198 = vmatmul.mubr.f32.gmra.mxu0 %v64
    %v199 = vpop.f32.mrf.mxu0
    %v200 = vadd.f32 0.0, %v199
    %v201 = vpop.f32.mrf.mxu0
    %202 = vmatprep.mubr.f32.mxu0 0.0
    %203 = vmatmul.mubr.f32.gmra.mxu0 %v67
    %v204 = vpop.f32.mrf.mxu0
    %v205 = vadd.f32 0.0, %v204
    %v206 = vpop.f32.mrf.mxu0
    %207 = vmatprep.mubr.f32.mxu0 0.0
    %208 = vmatmul.mubr.f32.gmra.mxu0 %v70
    %v209 = vpop.f32.mrf.mxu0
    %v210 = vadd.f32 0.0, %v209
    %v211 = vpop.f32.mrf.mxu0
    %212 = vmatprep.mubr.f32.mxu0 0.0
    %213 = vmatmul.mubr.f32.gmra.mxu0 %v73
    %v214 = vpop.f32.mrf.mxu0
    %v215 = vadd.f32 0.0, %v214
    %v216 = vpop.f32.mrf.mxu0
    %217 = vmatprep.mubr.f32.mxu0 0.0
    %218 = vmatmul.mubr.f32.gmra.mxu0 %v76
    %v219 = vpop.f32.mrf.mxu0
    %v220 = vadd.f32 0.0, %v219
    %v221 = vpop.f32.mrf.mxu0
    %222 = vmatprep.mubr.f32.mxu0 0.0
    %223 = vmatmul.mubr.f32.gmra.mxu0 %v79
    %v224 = vpop.f32.mrf.mxu0
    %v225 = vadd.f32 0.0, %v224
    %v226 = vpop.f32.mrf.mxu0
    %227 = vmatprep.mubr.f32.mxu0 0.0
    %228 = vmatmul.mubr.f32.gmra.mxu0 %v82
    %v229 = vpop.f32.mrf.mxu0
    %v230 = vadd.f32 0.0, %v229
    %v231 = vpop.f32.mrf.mxu0
    %232 = vdwg.mxu0
    %v233 = vmax.f32 %v155, 0.0
    %v234 = vmax.f32 %v160, 0.0
    %v235 = vmax.f32 %v165, 0.0
    %v236 = vmax.f32 %v170, 0.0
    %v237 = vmax.f32 %v175, 0.0
    %v238 = vmax.f32 %v180, 0.0
    %v239 = vmax.f32 %v185, 0.0
    %v240 = vmax.f32 %v190, 0.0
    %v241 = vmax.f32 %v195, 0.0
    %v242 = vmax.f32 %v200, 0.0
    %v243 = vmax.f32 %v205, 0.0
    %v244 = vmax.f32 %v210, 0.0
    %v245 = vmax.f32 %v215, 0.0
    %v246 = vmax.f32 %v220, 0.0
    %v247 = vmax.f32 %v225, 0.0
    %v248 = vmax.f32 %v230, 0.0
    %v249 = vld [vmem:[%s2] sm:$0x3]
    %v250 = vld [vmem:[%s3] sm:$0x3]
    %252 = vset.pattern.permute.xlu0 0
    %253 = vperm.xlu0 %252, %v250
    %v254 = vpop.permute.xlu0 %253
    %256 = vmatprep.subr.mxu0 0.0
    %257 = vmatpush1.msra.mxu0 %v248
    %258 = vmatprep.subr.mxu0 0.0
    %259 = vmatpush1.msra.mxu0 %v247
    %260 = vmatprep.subr.mxu0 0.0
    %261 = vmatpush1.msra.mxu0 %v246
    %262 = vmatprep.subr.mxu0 0.0
    %263 = vmatpush1.msra.mxu0 %v245
    %264 = vmatprep.subr.mxu0 0.0
    %265 = vmatpush1.msra.mxu0 %v244
    %266 = vmatprep.subr.mxu0 0.0
    %267 = vmatpush1.msra.mxu0 %v243
    %268 = vmatprep.subr.mxu0 0.0
    %269 = vmatpush1.msra.mxu0 %v242
    %270 = vmatprep.subr.mxu0 0.0
    %271 = vmatpush1.msra.mxu0 %v241
    %272 = vmatprep.subr.mxu0 0.0
    %273 = vmatpush1.msra.mxu0 %v240
    %274 = vmatprep.subr.mxu0 0.0
    %275 = vmatpush1.msra.mxu0 %v239
    %276 = vmatprep.subr.mxu0 0.0
    %277 = vmatpush1.msra.mxu0 %v238
    %278 = vmatprep.subr.mxu0 0.0
    %279 = vmatpush1.msra.mxu0 %v237
    %280 = vmatprep.subr.mxu0 0.0
    %281 = vmatpush1.msra.mxu0 %v236
    %282 = vmatprep.subr.mxu0 0.0
    %283 = vmatpush1.msra.mxu0 %v235
    %284 = vmatprep.subr.mxu0 0.0
    %285 = vmatpush1.msra.mxu0 %v234
    %286 = vmatprep.subr.mxu0 0.0
    %287 = vmatpush1.msra.mxu0 %v233
    %288 = vmatprep.subr.mxu0 0.0
    %289 = vmatpush2.msra.mxu0 0.0
    %290 = vmatprep.subr.mxu0 0.0
    %291 = vmatpush2.msra.mxu0 0.0
    %292 = vmatprep.subr.mxu0 0.0
    %293 = vmatpush2.msra.mxu0 0.0
    %294 = vmatprep.subr.mxu0 0.0
    %295 = vmatpush2.msra.mxu0 0.0
    %296 = vmatprep.subr.mxu0 0.0
    %297 = vmatpush2.msra.mxu0 0.0
    %298 = vmatprep.subr.mxu0 0.0
    %299 = vmatpush2.msra.mxu0 0.0
    %300 = vmatprep.subr.mxu0 0.0
    %301 = vmatpush2.msra.mxu0 0.0
    %302 = vmatprep.subr.mxu0 0.0
    %303 = vmatpush2.msra.mxu0 0.0
    %304 = vmatprep.subr.mxu0 0.0
    %305 = vmatpush2.msra.mxu0 0.0
    %306 = vmatprep.subr.mxu0 0.0
    %307 = vmatpush2.msra.mxu0 0.0
    %308 = vmatprep.subr.mxu0 0.0
    %309 = vmatpush2.msra.mxu0 0.0
    %310 = vmatprep.subr.mxu0 0.0
    %311 = vmatpush2.msra.mxu0 0.0
    %312 = vmatprep.subr.mxu0 0.0
    %313 = vmatpush2.msra.mxu0 0.0
    %314 = vmatprep.subr.mxu0 0.0
    %315 = vmatpush2.msra.mxu0 0.0
    %316 = vmatprep.subr.mxu0 0.0
    %317 = vmatpush2.msra.mxu0 0.0
    %318 = vmatprep.subr.mxu0 0.0
    %319 = vmatpush2.msra.mxu0 0.0
    %320 = vmatprep.mubr.f32.mxu0 0.0
    %321 = vmatmul.mubr.f32.gmra.mxu0 %v249
    %v322 = vpop.f32.mrf.mxu0
    %v323 = vadd.f32 %v254, %v322
    %v324 = vpop.f32.mrf.mxu0
    %325 = vdwg.mxu0
    %v327 = vrot.slane %v323, 7
    %v329 = vsub.f32 %v323, %v327
    %v330 = vmul.f32 %v329, 1.442695
    %v331 = vpow.pop %v330
    %v332 = vadd.f32 %v331, 1.0
    %v333 = vrcp.pop %v332
    %v334 = vmul.f32 1.0, %v333
    %335 = vst [vmem:[#allocation2 - $0x1] sm:$0x2] %v334
    %v336 = vrot.slane %v323, 1
    %v338 = vsub.f32 %v323, %v336
    %v339 = vmul.f32 %v338, 1.442695
    %v340 = vpow.pop %v339
    %v341 = vadd.f32 %v340, 1.0
    %v342 = vrcp.pop %v341
    %v343 = vmul.f32 1.0, %v342
    %344 = vst [vmem:[#allocation2 + $0x1] sm:$0x1] %v343
    // Predicated region
    $region18: #{tpu_custom_call.1} parent=1 // pred_check
      _
    $region19: #{tpu_custom_call.1} parent=1 // pred_check_branch
      %346 = sbr.rel (0) target = $region21
    $region20: #{tpu_custom_call.1} parent=1 // pred_region
      %s348 = ssub.s32 32, 32
      %349 = vsyncadd [#allocation3], %s348
      %s351 = sshll.u32 [#allocation2], 4
      %s352 = int_to_ptr.vmem [resolvable:$true] %s351
      %354 = dma.vmem_to_hbm [thread:$0]  %s352, 32, %s4, [#allocation3]
    $region21: #{tpu_custom_call.1} parent=1 // pred_fallthru
      _
    // Predicated region
    $region22: #{tpu_custom_call.1} parent=1 // pred_check
      _
    $region23: #{tpu_custom_call.1} parent=1 // pred_check_branch
      %356 = sbr.rel (0) target = $region25
    $region24: #{tpu_custom_call.1} parent=1 // pred_region
      %357 = dma.done [#allocation3], 32
    $region25: #{tpu_custom_call.1} parent=1 // pred_fallthru
      _
    %358 = vsyncpa [#allocation3], 1

</llo_original>
